<compile_context>
chip_gen: v5e
topology: v5e:2x2
jax: 0.10.0
libtpu: 0.0.40
codegen_flags: <defaults>
</compile_context>

<pallas_src>
import jax
import jax.numpy as jnp
from jax.experimental import pallas as pl
from jax.experimental.pallas import tpu as pltpu


def _hardswish(x):
    # Standard hardswish (used only by the pure-JAX reference).
    return x * jnp.clip(x + 3.0, 0.0, 6.0) * (1.0 / 6.0)


def _hswish_times6(x):
    # 6 * hardswish(x); the 1/6 is folded into the downstream weight columns.
    return x * jnp.clip(x + 3.0, 0.0, 6.0)


def _round_up(n, m):
    return ((n + m - 1) // m) * m


def critic_adv_kernel(x_ref, w0_ref, b0_ref, w1_ref, b1_ref, w2_ref, b2_ref,
                      w3_ref, b3_ref, o_ref, s_ref):
    half = w0_ref.shape[0]          # mid // 2
    mid = 2 * half
    cdtype = s_ref.dtype            # matmul compute dtype (bf16 or f32)

    # Batch-major (tm, S) tile -> feature-major (S, tm): batch rows stay on
    # the lane axis so every activation / the (1, tm) output is lane-dense.
    xt = x_ref[...].T.astype(cdtype)                                  # (S, tm)

    # Linear(state_dim, mid//2) + ReLU   (bias add / activation in f32)
    h = jnp.maximum(
        jnp.dot(w0_ref[...], xt, preferred_element_type=jnp.float32)
        + b0_ref[...], 0.0)                                           # (half, tm)
    h_c = h.astype(cdtype)
    s_ref[0:half, :] = h_c                                            # x1

    # DenseNet.dense1: Linear(half, half) + Hardswish (x6; 1/6 folded into W2/W3)
    d1 = _hswish_times6(
        jnp.dot(w1_ref[...], h_c, preferred_element_type=jnp.float32)
        + b1_ref[...])                                                # (half, tm)
    s_ref[half:mid, :] = d1.astype(cdtype)

    # DenseNet.dense2 on cat(x1, d1): the concat is just adjacent scratch rows.
    d2 = _hswish_times6(
        jnp.dot(w2_ref[...], s_ref[0:mid, :], preferred_element_type=jnp.float32)
        + b2_ref[...])                                                # (mid, tm)
    s_ref[mid:2 * mid, :] = d2.astype(cdtype)

    # Final Linear(2*mid, 1) on cat(x1, d1, d2) -> lane-dense (1, tm) output.
    out = (jnp.dot(w3_ref[...], s_ref[...], preferred_element_type=jnp.float32)
           + b3_ref[...])                                             # (1, tm)
    o_ref[...] = out.astype(o_ref.dtype)


def critic_adv_forward(state, params, past_state=None, att_bias=None, *,
                       tm=4096, compute_dtype=jnp.bfloat16):
    """state: (B, T, state_dim) float32. Returns (B, T, 1) float32.
    past_state / att_bias are unused by CriticAdv.forward (signature parity)."""
    del past_state, att_bias
    B, T, S = state.shape
    M = B * T
    w0, b0, w1, b1, w2, b2, w3, b3 = params
    half = w0.shape[0]              # mid // 2
    mid = w2.shape[0]               # mid
    assert mid == 2 * half
    # NOTE: for bf16 scratch stores, `half` should be a multiple of 16
    # (8 for f32) so the sublane writes stay pack-aligned; true for usual mid_dim.

    # Lane-aligned row tile: don't over-pad tiny inputs; keep >= 2 grid steps
    # (v7x megacore: two TensorCores share the "parallel" axis) when M allows.
    tm = max(128, _round_up(tm, 128))
    m128 = _round_up(M, 128)
    tm = min(tm, m128)
    if m128 >= 256:
        tm = min(tm, _round_up((m128 + 1) // 2, 128))
    M_pad = _round_up(M, tm)
    grid = M_pad // tm

    x2d = state.reshape(M, S)                     # free view, stays batch-major
    if M_pad != M:
        x2d = jnp.pad(x2d, ((0, M_pad - M), (0, 0)))   # pad only when ragged

    cdt = compute_dtype
    # Fold the hardswish 1/6 into the weight columns that consume d1 / d2.
    w2f = w2.at[:, half:].multiply(1.0 / 6.0)     # columns consuming d1
    w3f = w3.at[:, half:].multiply(1.0 / 6.0)     # columns consuming d1 and d2

    wc = lambda w: w.astype(cdt)                                   # MXU operands
    col = lambda b: b.reshape(-1, 1).astype(jnp.float32)           # lane-broadcast bias

    args = (x2d, wc(w0), col(b0), wc(w1), col(b1),
            wc(w2f), col(b2), wc(w3f), col(b3))
    full = lambda a: pl.BlockSpec(a.shape, lambda i: (0, 0))       # fetched once

    # TODO(synk): if a bundle dump shows exposed X DMA at very large tm, add
    # pipeline_mode=pl.Buffered(3) on the X BlockSpec.
    out = pl.pallas_call(
        critic_adv_kernel,
        out_shape=jax.ShapeDtypeStruct((1, M_pad), jnp.float32),
        grid_spec=pltpu.PrefetchScalarGridSpec(
            num_scalar_prefetch=0,
            grid=(grid,),
            in_specs=[pl.BlockSpec((tm, S), lambda i: (i, 0))]     # X rows tile
                     + [full(a) for a in args[1:]],
            out_specs=pl.BlockSpec((1, tm), lambda i: (0, i)),
            scratch_shapes=[pltpu.VMEM((2 * mid, tm), cdt)],       # [h; d1; d2]
        ),
        compiler_params=pltpu.CompilerParams(
            dimension_semantics=("parallel",),
            vmem_limit_bytes=32 * 1024 * 1024),
    )(*args)

    return out[0, :M].reshape(B, T, 1)


def init_params(key, state_dim, mid_dim):
    """Deterministic synthetic init matching the PyTorch layer shapes.
    Weights in torch layout: (out_features, in_features), bias (out,)."""
    half = mid_dim // 2
    out_dim = mid_dim * 2
    keys = jax.random.split(key, 8)

    def lin(kw, kb, fan_in, fan_out, w_scale=None, b_const=None):
        scale = w_scale if w_scale is not None else 1.0 / jnp.sqrt(fan_in)
        w = scale * jax.random.normal(kw, (fan_out, fan_in), jnp.float32)
        if b_const is not None:
            b = jnp.full((fan_out,), b_const, jnp.float32)
        else:
            b = scale * jax.random.normal(kb, (fan_out,), jnp.float32)
        return w, b

    w0, b0 = lin(keys[0], keys[1], state_dim, half)
    w1, b1 = lin(keys[2], keys[3], half, half)
    w2, b2 = lin(keys[4], keys[5], mid_dim, mid_dim)
    # last layer: layer_norm(layer, std=0.5, bias_const=1e-6) — synthetic
    # stand-in with the same scale (init is outside forward semantics).
    w3, b3 = lin(keys[6], keys[7], out_dim, 1,
                 w_scale=0.5 / jnp.sqrt(out_dim), b_const=1e-6)
    return (w0, b0, w1, b1, w2, b2, w3, b3)


def reference_forward(state, params):
    """Pure-JAX reference of the same network (torch-layout weights)."""
    w0, b0, w1, b1, w2, b2, w3, b3 = params
    x1 = jnp.maximum(state @ w0.T + b0, 0.0)
    d1 = _hardswish(x1 @ w1.T + b1)
    x2 = jnp.concatenate([x1, d1], axis=-1)
    d2 = _hardswish(x2 @ w2.T + b2)
    x3 = jnp.concatenate([x2, d2], axis=-1)
    return x3 @ w3.T + b3


if __name__ == "__main__":
    key = jax.random.PRNGKey(0)
    k_x, k_p, k_x2 = jax.random.split(key, 3)

    state_dim, mid_dim = 16, 32
    params = init_params(k_p, state_dim, mid_dim)

    # Case 1: small spec-sized input (single tile).
    B, T = 2, 8
    state = jax.random.normal(k_x, (B, T, state_dim), jnp.float32)
    ref = reference_forward(state, params)

    out_f32 = jax.block_until_ready(
        critic_adv_forward(state, params, compute_dtype=jnp.float32))
    assert out_f32.shape == (B, T, 1)
    assert jnp.allclose(out_f32, ref, atol=1e-4, rtol=1e-4)

    out_bf16 = jax.block_until_ready(
        critic_adv_forward(state, params, compute_dtype=jnp.bfloat16))
    assert jnp.allclose(out_bf16, ref, atol=3e-2, rtol=3e-2)

    # Case 2: multi-tile grid with a padded last tile (ragged M), grid >= 2.
    B2, T2 = 3, 700                         # M = 2100; tm=512 -> grid=5, ragged
    state2 = jax.random.normal(k_x2, (B2, T2, state_dim), jnp.float32)
    ref2 = reference_forward(state2, params)

    out2_f32 = jax.block_until_ready(
        critic_adv_forward(state2, params, tm=512, compute_dtype=jnp.float32))
    assert out2_f32.shape == (B2, T2, 1)
    assert jnp.allclose(out2_f32, ref2, atol=1e-4, rtol=1e-4)

    out2_bf16 = jax.block_until_ready(
        critic_adv_forward(state2, params, tm=512, compute_dtype=jnp.bfloat16))
    assert jnp.allclose(out2_bf16, ref2, atol=3e-2, rtol=3e-2)

    print("KERNEL_OK")
</pallas_src>

<mosaic_0001>
module attributes {stable_mosaic.version = 11 : i64} {
  func.func @critic_adv_kernel(%arg0: i32, %arg1: memref<128x16xf32, #tpu.memory_space<vmem>>, %arg2: memref<16x16xf32, #tpu.memory_space<vmem>>, %arg3: memref<16x1xf32, #tpu.memory_space<vmem>>, %arg4: memref<16x16xf32, #tpu.memory_space<vmem>>, %arg5: memref<16x1xf32, #tpu.memory_space<vmem>>, %arg6: memref<32x32xf32, #tpu.memory_space<vmem>>, %arg7: memref<32x1xf32, #tpu.memory_space<vmem>>, %arg8: memref<1x64xf32, #tpu.memory_space<vmem>>, %arg9: memref<1x1xf32, #tpu.memory_space<vmem>>, %arg10: memref<1x128xf32, #tpu.memory_space<vmem>>, %arg11: memref<64x128xf32, #tpu.memory_space<vmem>>) attributes {dimension_semantics = [#tpu.dimension_semantics<parallel>], iteration_bounds = array<i64: 1>, scalar_prefetch = 0 : i64, scratch_operands = 1 : i64, tpu.core_type = #tpu.core_type<tc>, window_params = [{transform_indices = @transform_0, window_bounds = array<i64: 128, 16>}, {pipeline_mode = #tpu.pipeline_mode<synchronous>, transform_indices = @transform_1, window_bounds = array<i64: 16, 16>}, {pipeline_mode = #tpu.pipeline_mode<synchronous>, transform_indices = @transform_2, window_bounds = array<i64: 16, 1>}, {pipeline_mode = #tpu.pipeline_mode<synchronous>, transform_indices = @transform_3, window_bounds = array<i64: 16, 16>}, {pipeline_mode = #tpu.pipeline_mode<synchronous>, transform_indices = @transform_4, window_bounds = array<i64: 16, 1>}, {pipeline_mode = #tpu.pipeline_mode<synchronous>, transform_indices = @transform_5, window_bounds = array<i64: 32, 32>}, {pipeline_mode = #tpu.pipeline_mode<synchronous>, transform_indices = @transform_6, window_bounds = array<i64: 32, 1>}, {pipeline_mode = #tpu.pipeline_mode<synchronous>, transform_indices = @transform_7, window_bounds = array<i64: 1, 64>}, {pipeline_mode = #tpu.pipeline_mode<synchronous>, transform_indices = @transform_8, window_bounds = array<i64: 1, 1>}, {transform_indices = @transform_9, window_bounds = array<i64: 1, 128>}]} {
    %c0 = arith.constant 0 : index
    %c0_0 = arith.constant 0 : index
    %0 = vector.load %arg1[%c0, %c0_0] : memref<128x16xf32, #tpu.memory_space<vmem>>, vector<128x16xf32>
    %1 = tpu.transpose %0, [1, 0] : vector<128x16xf32> -> vector<16x128xf32>
    %c0_1 = arith.constant 0 : index
    %c0_2 = arith.constant 0 : index
    %2 = vector.load %arg2[%c0_1, %c0_2] : memref<16x16xf32, #tpu.memory_space<vmem>>, vector<16x16xf32>
    %cst = arith.constant dense<0.000000e+00> : vector<16x128xf32>
    %3 = tpu.matmul %2, %1, %cst {dimension_numbers = #tpu.dot_dimension_numbers<[1], [0], [0], [1], [0, 0, 1, 1], [], []>} : vector<16x16xf32>, vector<16x128xf32>, vector<16x128xf32> -> vector<16x128xf32>
    %c0_3 = arith.constant 0 : index
    %c0_4 = arith.constant 0 : index
    %4 = vector.load %arg3[%c0_3, %c0_4] : memref<16x1xf32, #tpu.memory_space<vmem>>, vector<16x1xf32>
    %5 = vector.broadcast %4 : vector<16x1xf32> to vector<16x128xf32>
    %6 = arith.addf %3, %5 : vector<16x128xf32>
    %cst_5 = arith.constant 0.000000e+00 : f32
    %7 = vector.broadcast %cst_5 : f32 to vector<16x128xf32>
    %8 = arith.maximumf %6, %7 : vector<16x128xf32>
    %c0_6 = arith.constant 0 : index
    %c0_7 = arith.constant 0 : index
    %9 = vector.load %arg11[%c0_6, %c0_7] : memref<64x128xf32, #tpu.memory_space<vmem>>, vector<16x128xf32>
    tpu.vector_store %arg11[%c0_6, %c0_7], %8 {strides = array<i32>} : memref<64x128xf32, #tpu.memory_space<vmem>>, vector<16x128xf32>,
    %c0_8 = arith.constant 0 : index
    %c0_9 = arith.constant 0 : index
    %10 = vector.load %arg4[%c0_8, %c0_9] : memref<16x16xf32, #tpu.memory_space<vmem>>, vector<16x16xf32>
    %cst_10 = arith.constant dense<0.000000e+00> : vector<16x128xf32>
    %11 = tpu.matmul %10, %8, %cst_10 {dimension_numbers = #tpu.dot_dimension_numbers<[1], [0], [0], [1], [0, 0, 1, 1], [], []>} : vector<16x16xf32>, vector<16x128xf32>, vector<16x128xf32> -> vector<16x128xf32>
    %c0_11 = arith.constant 0 : index
    %c0_12 = arith.constant 0 : index
    %12 = vector.load %arg5[%c0_11, %c0_12] : memref<16x1xf32, #tpu.memory_space<vmem>>, vector<16x1xf32>
    %13 = vector.broadcast %12 : vector<16x1xf32> to vector<16x128xf32>
    %14 = arith.addf %11, %13 : vector<16x128xf32>
    %cst_13 = arith.constant 3.000000e+00 : f32
    %15 = vector.broadcast %cst_13 : f32 to vector<16x128xf32>
    %16 = arith.addf %14, %15 : vector<16x128xf32>
    %cst_14 = arith.constant 0.000000e+00 : f32
    %cst_15 = arith.constant 6.000000e+00 : f32
    %17 = vector.broadcast %cst_14 : f32 to vector<16x128xf32>
    %18 = arith.maximumf %17, %16 : vector<16x128xf32>
    %19 = vector.broadcast %cst_15 : f32 to vector<16x128xf32>
    %20 = arith.minimumf %19, %18 : vector<16x128xf32>
    %21 = arith.mulf %14, %20 : vector<16x128xf32>
    %c16 = arith.constant 16 : index
    %c0_16 = arith.constant 0 : index
    %22 = vector.load %arg11[%c16, %c0_16] : memref<64x128xf32, #tpu.memory_space<vmem>>, vector<16x128xf32>
    tpu.vector_store %arg11[%c16, %c0_16], %21 {strides = array<i32>} : memref<64x128xf32, #tpu.memory_space<vmem>>, vector<16x128xf32>,
    %c0_17 = arith.constant 0 : index
    %c0_18 = arith.constant 0 : index
    %23 = vector.load %arg6[%c0_17, %c0_18] : memref<32x32xf32, #tpu.memory_space<vmem>>, vector<32x32xf32>
    %c0_19 = arith.constant 0 : index
    %c0_20 = arith.constant 0 : index
    %24 = vector.load %arg11[%c0_19, %c0_20] : memref<64x128xf32, #tpu.memory_space<vmem>>, vector<32x128xf32>
    %cst_21 = arith.constant dense<0.000000e+00> : vector<32x128xf32>
    %25 = tpu.matmul %23, %24, %cst_21 {dimension_numbers = #tpu.dot_dimension_numbers<[1], [0], [0], [1], [0, 0, 1, 1], [], []>} : vector<32x32xf32>, vector<32x128xf32>, vector<32x128xf32> -> vector<32x128xf32>
    %c0_22 = arith.constant 0 : index
    %c0_23 = arith.constant 0 : index
    %26 = vector.load %arg7[%c0_22, %c0_23] : memref<32x1xf32, #tpu.memory_space<vmem>>, vector<32x1xf32>
    %27 = vector.broadcast %26 : vector<32x1xf32> to vector<32x128xf32>
    %28 = arith.addf %25, %27 : vector<32x128xf32>
    %cst_24 = arith.constant 3.000000e+00 : f32
    %29 = vector.broadcast %cst_24 : f32 to vector<32x128xf32>
    %30 = arith.addf %28, %29 : vector<32x128xf32>
    %cst_25 = arith.constant 0.000000e+00 : f32
    %cst_26 = arith.constant 6.000000e+00 : f32
    %31 = vector.broadcast %cst_25 : f32 to vector<32x128xf32>
    %32 = arith.maximumf %31, %30 : vector<32x128xf32>
    %33 = vector.broadcast %cst_26 : f32 to vector<32x128xf32>
    %34 = arith.minimumf %33, %32 : vector<32x128xf32>
    %35 = arith.mulf %28, %34 : vector<32x128xf32>
    %c32 = arith.constant 32 : index
    %c0_27 = arith.constant 0 : index
    %36 = vector.load %arg11[%c32, %c0_27] : memref<64x128xf32, #tpu.memory_space<vmem>>, vector<32x128xf32>
    tpu.vector_store %arg11[%c32, %c0_27], %35 {strides = array<i32>} : memref<64x128xf32, #tpu.memory_space<vmem>>, vector<32x128xf32>,
    %c0_28 = arith.constant 0 : index
    %c0_29 = arith.constant 0 : index
    %37 = vector.load %arg8[%c0_28, %c0_29] : memref<1x64xf32, #tpu.memory_space<vmem>>, vector<1x64xf32>
    %c0_30 = arith.constant 0 : index
    %c0_31 = arith.constant 0 : index
    %38 = vector.load %arg11[%c0_30, %c0_31] : memref<64x128xf32, #tpu.memory_space<vmem>>, vector<64x128xf32>
    %cst_32 = arith.constant dense<0.000000e+00> : vector<1x128xf32>
    %39 = tpu.matmul %37, %38, %cst_32 {dimension_numbers = #tpu.dot_dimension_numbers<[1], [0], [0], [1], [0, 0, 1, 1], [], []>} : vector<1x64xf32>, vector<64x128xf32>, vector<1x128xf32> -> vector<1x128xf32>
    %c0_33 = arith.constant 0 : index
    %c0_34 = arith.constant 0 : index
    %40 = vector.load %arg9[%c0_33, %c0_34] : memref<1x1xf32, #tpu.memory_space<vmem>>, vector<1x1xf32>
    %41 = vector.broadcast %40 : vector<1x1xf32> to vector<1x128xf32>
    %42 = arith.addf %39, %41 : vector<1x128xf32>
    %c0_35 = arith.constant 0 : index
    %c0_36 = arith.constant 0 : index
    %43 = vector.load %arg10[%c0_35, %c0_36] : memref<1x128xf32, #tpu.memory_space<vmem>>, vector<1x128xf32>
    tpu.vector_store %arg10[%c0_35, %c0_36], %42 {strides = array<i32>} : memref<1x128xf32, #tpu.memory_space<vmem>>, vector<1x128xf32>,
    return
  }
  func.func @transform_0(%arg0: i32) -> (i32, i32) {
    %c0_i32 = arith.constant 0 : i32
    %c0_i32_0 = arith.constant 0 : i32
    return %arg0, %c0_i32 : i32, i32
  }
  func.func @transform_1(%arg0: i32) -> (i32, i32) {
    %c0_i32 = arith.constant 0 : i32
    %c0_i32_0 = arith.constant 0 : i32
    %c0_i32_1 = arith.constant 0 : i32
    return %c0_i32, %c0_i32_0 : i32, i32
  }
  func.func @transform_2(%arg0: i32) -> (i32, i32) {
    %c0_i32 = arith.constant 0 : i32
    %c0_i32_0 = arith.constant 0 : i32
    %c0_i32_1 = arith.constant 0 : i32
    return %c0_i32, %c0_i32_0 : i32, i32
  }
  func.func @transform_3(%arg0: i32) -> (i32, i32) {
    %c0_i32 = arith.constant 0 : i32
    %c0_i32_0 = arith.constant 0 : i32
    %c0_i32_1 = arith.constant 0 : i32
    return %c0_i32, %c0_i32_0 : i32, i32
  }
  func.func @transform_4(%arg0: i32) -> (i32, i32) {
    %c0_i32 = arith.constant 0 : i32
    %c0_i32_0 = arith.constant 0 : i32
    %c0_i32_1 = arith.constant 0 : i32
    return %c0_i32, %c0_i32_0 : i32, i32
  }
  func.func @transform_5(%arg0: i32) -> (i32, i32) {
    %c0_i32 = arith.constant 0 : i32
    %c0_i32_0 = arith.constant 0 : i32
    %c0_i32_1 = arith.constant 0 : i32
    return %c0_i32, %c0_i32_0 : i32, i32
  }
  func.func @transform_6(%arg0: i32) -> (i32, i32) {
    %c0_i32 = arith.constant 0 : i32
    %c0_i32_0 = arith.constant 0 : i32
    %c0_i32_1 = arith.constant 0 : i32
    return %c0_i32, %c0_i32_0 : i32, i32
  }
  func.func @transform_7(%arg0: i32) -> (i32, i32) {
    %c0_i32 = arith.constant 0 : i32
    %c0_i32_0 = arith.constant 0 : i32
    %c0_i32_1 = arith.constant 0 : i32
    return %c0_i32, %c0_i32_0 : i32, i32
  }
  func.func @transform_8(%arg0: i32) -> (i32, i32) {
    %c0_i32 = arith.constant 0 : i32
    %c0_i32_0 = arith.constant 0 : i32
    %c0_i32_1 = arith.constant 0 : i32
    return %c0_i32, %c0_i32_0 : i32, i32
  }
  func.func @transform_9(%arg0: i32) -> (i32, i32) {
    %c0_i32 = arith.constant 0 : i32
    %c0_i32_0 = arith.constant 0 : i32
    return %c0_i32, %arg0 : i32, i32
  }
}

</mosaic_0001>

<llo_original>
// kernel: tpu_custom_call.1
$region0: #{tpu_custom_call.1}
  #allocation0 [shape = 'u32[]', space=smem, size = 0x4, offset = 0x4, fixed_abs, tag = 'smem constant byte address 0x4 - core index']
  #allocation1 [shape = 'u32[72,128]{1,0:T(1,128)}', space=vmem, size = 0x9000, scoped, tag = 'internal scratch']
  #allocation2 [shape = 'f32[64,128]{1,0:T(8,128)}', space=vmem, size = 0x8000, scoped, tag = 'scratch operand']
  #allocation3 [shape = 'f32[1,1]{1,0:T(1,128)S(1)}', space=vmem, size = 0x200, scoped, tag = 'scoped memory for tpu_custom_call.1']
  %s0 = inlined_call_operand.vmem [shape: f32[128,16], index: 0, kind: input, shape index: {}]
  %s1 = inlined_call_operand.vmem [shape: f32[16,16], index: 1, kind: input, shape index: {}]
  %s2 = inlined_call_operand.vmem [shape: f32[16,1], index: 2, kind: input, shape index: {}]
  %s3 = inlined_call_operand.vmem [shape: f32[16,16], index: 3, kind: input, shape index: {}]
  %s4 = inlined_call_operand.vmem [shape: f32[16,1], index: 4, kind: input, shape index: {}]
  %s5 = inlined_call_operand.vmem [shape: f32[32,32], index: 5, kind: input, shape index: {}]
  %s6 = inlined_call_operand.vmem [shape: f32[32,1], index: 6, kind: input, shape index: {}]
  %s7 = inlined_call_operand.vmem [shape: f32[1,64], index: 7, kind: input, shape index: {}]
  %s8 = inlined_call_operand.<no memory space> [shape: f32[1,1], index: 8, kind: input, shape index: {}]
  %s9 = inlined_call_operand.hbm [shape: f32[1,128], index: 9, kind: output, shape index: {}]
  %s10 = sld [smem:[#allocation0]]
  $region46: #{tpu_custom_call.1} parent=0
    _
  %s12 = ssub.s32 1, %s10
  %s13 = scalar_select 0, %s12, %s10
  %v14 = vstv %s8
  %15 = vst [vmem:[#allocation3] sm:$0x1] %v14
  $region1: #{tpu_custom_call.1} parent=0
    #allocation4 [shape = 'u8[512]{0}', space=vmem, size = 0x400, scoped, tag = 'output window, operand 0, single buffered']
    #allocation5 [shape = 's32[1]{0}', space=sflag, size = 0x4, scoped, tag = 'scoped memory for tpu_custom_call.1']
    %16 = vsyncpa [#allocation5], 0
    // Predicated region
    $region2: #{tpu_custom_call.1} parent=1 // pred_check
      _
    $region3: #{tpu_custom_call.1} parent=1 // pred_check_branch
      %18 = sbr.rel (0) target = $region5
    $region4: #{tpu_custom_call.1} parent=1 // pred_region
      _
    $region5: #{tpu_custom_call.1} parent=1 // pred_fallthru
      _
    // Predicated region
    $region6: #{tpu_custom_call.1} parent=1 // pred_check
      _
    $region7: #{tpu_custom_call.1} parent=1 // pred_check_branch
      %20 = sbr.rel (0) target = $region9
    $region8: #{tpu_custom_call.1} parent=1 // pred_region
      _
    $region9: #{tpu_custom_call.1} parent=1 // pred_fallthru
      _
    // Predicated region
    $region10: #{tpu_custom_call.1} parent=1 // pred_check
      _
    $region11: #{tpu_custom_call.1} parent=1 // pred_check_branch
      %22 = sbr.rel (0) target = $region13
    $region12: #{tpu_custom_call.1} parent=1 // pred_region
      _
    $region13: #{tpu_custom_call.1} parent=1 // pred_fallthru
      _
    // Predicated region
    $region14: #{tpu_custom_call.1} parent=1 // pred_check
      _
    $region15: #{tpu_custom_call.1} parent=1 // pred_check_branch
      %24 = sbr.rel (0) target = $region17
    $region16: #{tpu_custom_call.1} parent=1 // pred_region
      _
    $region17: #{tpu_custom_call.1} parent=1 // pred_fallthru
      _
    // Predicated region
    $region18: #{tpu_custom_call.1} parent=1 // pred_check
      _
    $region19: #{tpu_custom_call.1} parent=1 // pred_check_branch
      %26 = sbr.rel (0) target = $region21
    $region20: #{tpu_custom_call.1} parent=1 // pred_region
      _
    $region21: #{tpu_custom_call.1} parent=1 // pred_fallthru
      _
    // Predicated region
    $region22: #{tpu_custom_call.1} parent=1 // pred_check
      _
    $region23: #{tpu_custom_call.1} parent=1 // pred_check_branch
      %28 = sbr.rel (0) target = $region25
    $region24: #{tpu_custom_call.1} parent=1 // pred_region
      _
    $region25: #{tpu_custom_call.1} parent=1 // pred_fallthru
      _
    // Predicated region
    $region26: #{tpu_custom_call.1} parent=1 // pred_check
      _
    $region27: #{tpu_custom_call.1} parent=1 // pred_check_branch
      %30 = sbr.rel (0) target = $region29
    $region28: #{tpu_custom_call.1} parent=1 // pred_region
      _
    $region29: #{tpu_custom_call.1} parent=1 // pred_fallthru
      _
    // Predicated region
    $region30: #{tpu_custom_call.1} parent=1 // pred_check
      _
    $region31: #{tpu_custom_call.1} parent=1 // pred_check_branch
      %32 = sbr.rel (0) target = $region33
    $region32: #{tpu_custom_call.1} parent=1 // pred_region
      _
    $region33: #{tpu_custom_call.1} parent=1 // pred_fallthru
      _
    // Predicated region
    $region34: #{tpu_custom_call.1} parent=1 // pred_check
      _
    $region35: #{tpu_custom_call.1} parent=1 // pred_check_branch
      %34 = sbr.rel (0) target = $region37
    $region36: #{tpu_custom_call.1} parent=1 // pred_region
      _
    $region37: #{tpu_custom_call.1} parent=1 // pred_fallthru
      _
    %v35 = vld [vmem:[%s0] sm:$0xff]
    %v36 = vld [vmem:[%s0 + $0x8] sm:$0xff]
    %v37 = vld [vmem:[%s0 + $0x10] sm:$0xff]
    %v38 = vld [vmem:[%s0 + $0x18] sm:$0xff]
    %v39 = vld [vmem:[%s0 + $0x20] sm:$0xff]
    %v40 = vld [vmem:[%s0 + $0x28] sm:$0xff]
    %v41 = vld [vmem:[%s0 + $0x30] sm:$0xff]
    %v42 = vld [vmem:[%s0 + $0x38] sm:$0xff]
    %v43 = vld [vmem:[%s0 + $0x40] sm:$0xff]
    %v44 = vld [vmem:[%s0 + $0x48] sm:$0xff]
    %v45 = vld [vmem:[%s0 + $0x50] sm:$0xff]
    %v46 = vld [vmem:[%s0 + $0x58] sm:$0xff]
    %v47 = vld [vmem:[%s0 + $0x60] sm:$0xff]
    %v48 = vld [vmem:[%s0 + $0x68] sm:$0xff]
    %v49 = vld [vmem:[%s0 + $0x70] sm:$0xff]
    %v50 = vld [vmem:[%s0 + $0x78] sm:$0xff]
    %v51 = vld [vmem:[%s1] sm:$0xff]
    %v52 = vld [vmem:[%s1 + $0x8] sm:$0xff]
    %v53 = vld [vmem:[%s2] sm:$0xff]
    %v54 = vld [vmem:[%s2 + $0x8] sm:$0xff]
    %56 = vset.pattern.permute.xlu0 0
    %57 = vperm.xlu0 %56, %v53
    %v58 = vpop.permute.xlu0 %57
    %61 = vset.pattern.permute.xlu0 0
    %62 = vperm.xlu0 %61, %v54
    %v63 = vpop.permute.xlu0 %62
    %vm65 = vcmask 130048
    %v67 = vsel %vm65, %v51, 0
    %v70 = vsel %vm65, %v52, 0
    %v73 = vsel %vm65, %v35, 0
    %v76 = vsel %vm65, %v36, 0
    %v79 = vsel %vm65, %v37, 0
    %v82 = vsel %vm65, %v38, 0
    %v85 = vsel %vm65, %v39, 0
    %v88 = vsel %vm65, %v40, 0
    %v91 = vsel %vm65, %v41, 0
    %v94 = vsel %vm65, %v42, 0
    %v97 = vsel %vm65, %v43, 0
    %v100 = vsel %vm65, %v44, 0
    %v103 = vsel %vm65, %v45, 0
    %v106 = vsel %vm65, %v46, 0
    %v109 = vsel %vm65, %v47, 0
    %v112 = vsel %vm65, %v48, 0
    %v115 = vsel %vm65, %v49, 0
    %v118 = vsel %vm65, %v50, 0
    %120 = vmatpush.xpose.msra.mxu0 %v118
    %121 = vmatpush.xpose.msra.mxu0 %v115
    %122 = vmatpush.xpose.msra.mxu0 %v112
    %123 = vmatpush.xpose.msra.mxu0 %v109
    %124 = vmatpush.xpose.msra.mxu0 %v106
    %125 = vmatpush.xpose.msra.mxu0 %v103
    %126 = vmatpush.xpose.msra.mxu0 %v100
    %127 = vmatpush.xpose.msra.mxu0 %v97
    %128 = vmatpush.xpose.msra.mxu0 %v94
    %129 = vmatpush.xpose.msra.mxu0 %v91
    %130 = vmatpush.xpose.msra.mxu0 %v88
    %131 = vmatpush.xpose.msra.mxu0 %v85
    %132 = vmatpush.xpose.msra.mxu0 %v82
    %133 = vmatpush.xpose.msra.mxu0 %v79
    %134 = vmatpush.xpose.msra.mxu0 %v76
    %135 = vmatpush.xpose.msra.mxu0 %v73
    %136 = vmatmul.f32.gmra.mxu0 %v67
    %v137 = vpop.f32.mrf.mxu0
    %v138 = vadd.f32 %v58, %v137
    %139 = vmatmul.f32.gmra.mxu0 %v70
    %v140 = vpop.f32.mrf.mxu0
    %v141 = vadd.f32 %v63, %v140
    %142 = vdwg.mxu0
    %v143 = vmax.f32 %v138, 0.0
    %v144 = vmax.f32 %v141, 0.0
    %145 = vst [vmem:[#allocation2] sm:$0xff] %v143
    %146 = vst [vmem:[#allocation2 + $0x8] sm:$0xff] %v144
    %v147 = vld [vmem:[%s3] sm:$0xff]
    %v148 = vld [vmem:[%s3 + $0x8] sm:$0xff]
    %v149 = vld [vmem:[%s4] sm:$0xff]
    %v150 = vld [vmem:[%s4 + $0x8] sm:$0xff]
    %152 = vset.pattern.permute.xlu0 0
    %153 = vperm.xlu0 %152, %v149
    %v154 = vpop.permute.xlu0 %153
    %157 = vset.pattern.permute.xlu0 0
    %158 = vperm.xlu0 %157, %v150
    %v159 = vpop.permute.xlu0 %158
    %v162 = vsel %vm65, %v147, 0
    %v165 = vsel %vm65, %v148, 0
    %167 = vmatpush.msra.mxu0 0.0
    %168 = vmatpush.msra.mxu0 0.0
    %169 = vmatpush.msra.mxu0 0.0
    %170 = vmatpush.msra.mxu0 0.0
    %171 = vmatpush.msra.mxu0 0.0
    %172 = vmatpush.msra.mxu0 0.0
    %173 = vmatpush.msra.mxu0 0.0
    %174 = vmatpush.msra.mxu0 0.0
    %175 = vmatpush.msra.mxu0 0.0
    %176 = vmatpush.msra.mxu0 0.0
    %177 = vmatpush.msra.mxu0 0.0
    %178 = vmatpush.msra.mxu0 0.0
    %179 = vmatpush.msra.mxu0 0.0
    %180 = vmatpush.msra.mxu0 0.0
    %181 = vmatpush.msra.mxu0 %v144
    %182 = vmatpush.msra.mxu0 %v143
    %183 = vmatmul.f32.gmra.mxu0 %v162
    %v184 = vpop.f32.mrf.mxu0
    %v185 = vadd.f32 %v154, %v184
    %186 = vmatmul.f32.gmra.mxu0 %v165
    %v187 = vpop.f32.mrf.mxu0
    %v188 = vadd.f32 %v159, %v187
    %189 = vdwg.mxu0
    %v190 = vadd.f32 %v185, 3.0
    %v191 = vadd.f32 %v188, 3.0
    %v192 = vmax.f32 %v190, 0.0
    %v193 = vmax.f32 %v191, 0.0
    %v194 = vmin.f32 %v192, 6.0
    %v195 = vmin.f32 %v193, 6.0
    %v196 = vmul.f32 %v185, %v194
    %v197 = vmul.f32 %v188, %v195
    %198 = vst [vmem:[#allocation2 + $0x10] sm:$0xff] %v196
    %199 = vst [vmem:[#allocation2 + $0x18] sm:$0xff] %v197
    %v200 = vld [vmem:[%s5] sm:$0xff]
    %v201 = vld [vmem:[%s5 + $0x8] sm:$0xff]
    %v202 = vld [vmem:[%s5 + $0x10] sm:$0xff]
    %v203 = vld [vmem:[%s5 + $0x18] sm:$0xff]
    %v204 = vld [vmem:[#allocation2] sm:$0xff]
    %v205 = vld [vmem:[#allocation2 + $0x8] sm:$0xff]
    %v206 = vld [vmem:[#allocation2 + $0x10] sm:$0xff]
    %v207 = vld [vmem:[#allocation2 + $0x18] sm:$0xff]
    %v208 = vld [vmem:[%s6] sm:$0xff]
    %v209 = vld [vmem:[%s6 + $0x8] sm:$0xff]
    %v210 = vld [vmem:[%s6 + $0x10] sm:$0xff]
    %v211 = vld [vmem:[%s6 + $0x18] sm:$0xff]
    %213 = vset.pattern.permute.xlu0 0
    %214 = vperm.xlu0 %213, %v208
    %v215 = vpop.permute.xlu0 %214
    %218 = vset.pattern.permute.xlu0 0
    %219 = vperm.xlu0 %218, %v209
    %v220 = vpop.permute.xlu0 %219
    %223 = vset.pattern.permute.xlu0 0
    %224 = vperm.xlu0 %223, %v210
    %v225 = vpop.permute.xlu0 %224
    %228 = vset.pattern.permute.xlu0 0
    %229 = vperm.xlu0 %228, %v211
    %v230 = vpop.permute.xlu0 %229
    %vm232 = vcmask 261120
    %v234 = vsel %vm232, %v200, 0
    %v237 = vsel %vm232, %v201, 0
    %v240 = vsel %vm232, %v202, 0
    %v243 = vsel %vm232, %v203, 0
    %245 = vmatpush.msra.mxu0 0.0
    %246 = vmatpush.msra.mxu0 0.0
    %247 = vmatpush.msra.mxu0 0.0
    %248 = vmatpush.msra.mxu0 0.0
    %249 = vmatpush.msra.mxu0 0.0
    %250 = vmatpush.msra.mxu0 0.0
    %251 = vmatpush.msra.mxu0 0.0
    %252 = vmatpush.msra.mxu0 0.0
    %253 = vmatpush.msra.mxu0 0.0
    %254 = vmatpush.msra.mxu0 0.0
    %255 = vmatpush.msra.mxu0 0.0
    %256 = vmatpush.msra.mxu0 0.0
    %257 = vmatpush.msra.mxu0 %v207
    %258 = vmatpush.msra.mxu0 %v206
    %259 = vmatpush.msra.mxu0 %v205
    %260 = vmatpush.msra.mxu0 %v204
    %261 = vmatmul.f32.gmra.mxu0 %v234
    %v262 = vpop.f32.mrf.mxu0
    %v263 = vadd.f32 %v215, %v262
    %264 = vmatmul.f32.gmra.mxu0 %v237
    %v265 = vpop.f32.mrf.mxu0
    %v266 = vadd.f32 %v220, %v265
    %267 = vmatmul.f32.gmra.mxu0 %v240
    %v268 = vpop.f32.mrf.mxu0
    %v269 = vadd.f32 %v225, %v268
    %270 = vmatmul.f32.gmra.mxu0 %v243
    %v271 = vpop.f32.mrf.mxu0
    %v272 = vadd.f32 %v230, %v271
    %273 = vdwg.mxu0
    %v274 = vadd.f32 %v263, 3.0
    %v275 = vadd.f32 %v266, 3.0
    %v276 = vadd.f32 %v269, 3.0
    %v277 = vadd.f32 %v272, 3.0
    %v278 = vmax.f32 %v274, 0.0
    %v279 = vmax.f32 %v275, 0.0
    %v280 = vmax.f32 %v276, 0.0
    %v281 = vmax.f32 %v277, 0.0
    %v282 = vmin.f32 %v278, 6.0
    %v283 = vmin.f32 %v279, 6.0
    %v284 = vmin.f32 %v280, 6.0
    %v285 = vmin.f32 %v281, 6.0
    %v286 = vmul.f32 %v263, %v282
    %v287 = vmul.f32 %v266, %v283
    %v288 = vmul.f32 %v269, %v284
    %v289 = vmul.f32 %v272, %v285
    %290 = vst [vmem:[#allocation2 + $0x20] sm:$0xff] %v286
    %291 = vst [vmem:[#allocation2 + $0x28] sm:$0xff] %v287
    %292 = vst [vmem:[#allocation2 + $0x30] sm:$0xff] %v288
    %293 = vst [vmem:[#allocation2 + $0x38] sm:$0xff] %v289
    %v294 = vld [vmem:[%s7] sm:$0x1]
    %v295 = vld [vmem:[#allocation2] sm:$0xff]
    %v296 = vld [vmem:[#allocation2 + $0x8] sm:$0xff]
    %v297 = vld [vmem:[#allocation2 + $0x10] sm:$0xff]
    %v298 = vld [vmem:[#allocation2 + $0x18] sm:$0xff]
    %v299 = vld [vmem:[#allocation2 + $0x20] sm:$0xff]
    %v300 = vld [vmem:[#allocation2 + $0x28] sm:$0xff]
    %v301 = vld [vmem:[#allocation2 + $0x30] sm:$0xff]
    %v302 = vld [vmem:[#allocation2 + $0x38] sm:$0xff]
    %v303 = vld [vmem:[#allocation3] sm:$0x1]
    %305 = vset.pattern.permute.xlu0 0
    %306 = vperm.xlu0 %305, %v303
    %v307 = vpop.permute.xlu0 %306
    %v309 = vperm.slane %v307, 0
    %vm310 = vcmask 523264
    %v312 = vsel %vm310, %v294, 0
    %314 = vmatpush.msra.mxu0 0.0
    %315 = vmatpush.msra.mxu0 0.0
    %316 = vmatpush.msra.mxu0 0.0
    %317 = vmatpush.msra.mxu0 0.0
    %318 = vmatpush.msra.mxu0 0.0
    %319 = vmatpush.msra.mxu0 0.0
    %320 = vmatpush.msra.mxu0 0.0
    %321 = vmatpush.msra.mxu0 0.0
    %322 = vmatpush.msra.mxu0 %v302
    %323 = vmatpush.msra.mxu0 %v301
    %324 = vmatpush.msra.mxu0 %v300
    %325 = vmatpush.msra.mxu0 %v299
    %326 = vmatpush.msra.mxu0 %v298
    %327 = vmatpush.msra.mxu0 %v297
    %328 = vmatpush.msra.mxu0 %v296
    %329 = vmatpush.msra.mxu0 %v295
    %330 = vmatmul.f32.gmra.mxu0 %v312
    %v331 = vpop.f32.mrf.mxu0
    %v332 = vadd.f32 %v309, %v331
    %333 = vdwg.mxu0
    %334 = vst [vmem:[#allocation4] sm:$0x1] %v332
    // Predicated region
    $region38: #{tpu_custom_call.1} parent=1 // pred_check
      _
    $region39: #{tpu_custom_call.1} parent=1 // pred_check_branch
      %336 = sbr.rel (0) target = $region41
    $region40: #{tpu_custom_call.1} parent=1 // pred_region
      %338 = vsyncadd [#allocation5], 0
      %s340 = sshll.u32 [#allocation4], 4
      %s341 = int_to_ptr.vmem [resolvable:$true] %s340
      %s342 = sshll.u32 %s9, 4
      %s343 = int_to_ptr.hbm [resolvable:$true] %s342
      %345 = dma.vmem_to_hbm [thread:$0]  %s341, 16, %s343, [#allocation5]
    $region41: #{tpu_custom_call.1} parent=1 // pred_fallthru
      _
    // Predicated region
    $region42: #{tpu_custom_call.1} parent=1 // pred_check
      _
    $region43: #{tpu_custom_call.1} parent=1 // pred_check_branch
      %347 = sbr.rel (0) target = $region45
    $region44: #{tpu_custom_call.1} parent=1 // pred_region
      %349 = dma.done [#allocation5], 16
    $region45: #{tpu_custom_call.1} parent=1 // pred_fallthru
      _
    %350 = vsyncpa [#allocation5], 1

</llo_original>
